<compile_context>
chip_gen: v7x
topology: tpu7x:2x2x1
jax: 0.10.0
libtpu: 0.0.40
codegen_flags: <defaults>
</compile_context>

<pallas_src>
import functools

import jax
import jax.numpy as jnp
import numpy as np
from jax.experimental import pallas as pl
from jax.experimental.pallas import tpu as pltpu


def _mlp_kernel(x_ref, w1_ref, b1_ref, w2_ref, b2_ref, w3_ref, b3_ref, o_ref):
    # fc1 + ReLU (recomputed per out_dim tile; ~2 MFLOP -> hides under the w3 DMA)
    h1 = jnp.dot(x_ref[...], w1_ref[...], preferred_element_type=jnp.float32)
    h1 = jnp.maximum(h1 + b1_ref[...], 0.0).astype(jnp.bfloat16)
    # fc2 + ReLU
    h2 = jnp.dot(h1, w2_ref[...], preferred_element_type=jnp.float32)
    h2 = jnp.maximum(h2 + b2_ref[...], 0.0).astype(jnp.bfloat16)
    # fc3 tile + sigmoid
    h3 = jnp.dot(h2, w3_ref[...], preferred_element_type=jnp.float32)
    o_ref[...] = jax.nn.sigmoid(h3 + b3_ref[...])


def _round_up(x, m):
    return (x + m - 1) // m * m


def prepare_params(params, image_size):
    """ONE-TIME preprocessing (do NOT call per forward pass):
    cast weights to bf16, reshape biases to f32 rows, pad fc3 weight/bias to a
    lane-aligned (multiple-of-128) output dimension."""
    w1, b1, w2, b2, w3, b3 = params
    out_dim = image_size * image_size
    assert w3.shape[1] == out_dim
    out_dim_pad = _round_up(out_dim, 128)
    pad = out_dim_pad - out_dim

    w1b = w1.astype(jnp.bfloat16)
    w2b = w2.astype(jnp.bfloat16)
    w3b = w3.astype(jnp.bfloat16)
    b1f = b1.astype(jnp.float32).reshape(1, -1)
    b2f = b2.astype(jnp.float32).reshape(1, -1)
    b3f = b3.astype(jnp.float32).reshape(1, -1)
    if pad:
        w3b = jnp.pad(w3b, ((0, 0), (0, pad)))
        b3f = jnp.pad(b3f, ((0, 0), (0, pad)))
    return (w1b, b1f, w2b, b2f, w3b, b3f)


def _choose_tiling(out_dim_pad, tile_n):
    tn = min(_round_up(tile_n, 128), out_dim_pad)
    num_tiles = pl.cdiv(out_dim_pad, tn)
    # v7x megacore: guarantee >=2 grid steps when the padded dim allows it.
    if num_tiles < 2 and out_dim_pad >= 256:
        tn = _round_up(out_dim_pad // 2, 128)
        num_tiles = pl.cdiv(out_dim_pad, tn)
    return tn, num_tiles


@functools.partial(jax.jit, static_argnames=("image_size", "tile_n"))
def fc_data_generator(x, prepped, image_size, *, tile_n=8192):
    """x: (B, ...) -> flattened to (B, latent). prepped: output of prepare_params().
    Returns (B, 1, image_size, image_size) float32."""
    w1b, b1f, w2b, b2f, w3b, b3f = prepped
    B = x.shape[0]
    x2 = x.reshape(B, -1).astype(jnp.bfloat16)        # tiny; cheap per call
    latent = x2.shape[1]
    h1_dim = w1b.shape[1]
    h2_dim = w2b.shape[1]
    out_dim = image_size * image_size
    out_dim_pad = w3b.shape[1]
    assert out_dim_pad == _round_up(out_dim, 128)

    tn, num_tiles = _choose_tiling(out_dim_pad, tile_n)

    # Resident blocks: index_map always returns block 0 -> DMA'd once, kept in VMEM.
    def resident(shape):
        return pl.BlockSpec(shape, lambda j: tuple(0 for _ in shape))

    # Scoped-VMEM budget: double-buffered streaming tiles + resident inputs + headroom.
    stream_bytes = 2 * (h2_dim * tn * 2 + tn * 4 + B * tn * 4)
    resident_bytes = 2 * (B * latent * 2 + latent * h1_dim * 2 + h1_dim * 4
                          + h1_dim * h2_dim * 2 + h2_dim * 4)
    vmem_limit = min(48 * 1024 * 1024,
                     max(stream_bytes + resident_bytes + (8 << 20), 16 << 20))

    cost = pl.CostEstimate(
        flops=2 * B * (latent * h1_dim + h1_dim * h2_dim) * num_tiles
        + 2 * B * h2_dim * out_dim_pad,
        transcendentals=B * out_dim_pad,
        bytes_accessed=2 * (x2.size + w1b.size + w2b.size + w3b.size)
        + 4 * (b1f.size + b2f.size + b3f.size)
        + 4 * B * out_dim_pad,
    )

    out_flat = pl.pallas_call(
        _mlp_kernel,
        out_shape=jax.ShapeDtypeStruct((B, out_dim_pad), jnp.float32),
        grid=(num_tiles,),
        in_specs=[
            resident((B, latent)),
            resident((latent, h1_dim)),
            resident((1, h1_dim)),
            resident((h1_dim, h2_dim)),
            resident((1, h2_dim)),
            pl.BlockSpec((h2_dim, tn), lambda j: (0, j)),
            pl.BlockSpec((1, tn), lambda j: (0, j)),
        ],
        out_specs=pl.BlockSpec((B, tn), lambda j: (0, j)),
        compiler_params=pltpu.CompilerParams(
            dimension_semantics=("parallel",),
            vmem_limit_bytes=int(vmem_limit),
        ),
        cost_estimate=cost,
    )(x2, w1b, b1f, w2b, b2f, w3b, b3f)

    return out_flat[:, :out_dim].reshape(B, 1, image_size, image_size)


def fc_data_generator_ref(x, params, image_size):
    """Pure-JAX f32 reference matching the torch module."""
    w1, b1, w2, b2, w3, b3 = params
    B = x.shape[0]
    h = x.reshape(B, -1)
    h = jax.nn.relu(h @ w1 + b1.reshape(1, -1))
    h = jax.nn.relu(h @ w2 + b2.reshape(1, -1))
    h = jax.nn.sigmoid(h @ w3 + b3.reshape(1, -1))
    return h.reshape(B, 1, image_size, image_size)


def init_params(key, latent_size, image_size):
    """Deterministic init mimicking torch.nn.Linear default (uniform +-1/sqrt(fan_in)).
    Weights stored as (in_features, out_features)."""
    dims = [(latent_size, 256), (256, 512), (512, image_size * image_size)]
    params = []
    for fan_in, fan_out in dims:
        key, kw, kb = jax.random.split(key, 3)
        bound = 1.0 / jnp.sqrt(jnp.float32(fan_in))
        w = jax.random.uniform(kw, (fan_in, fan_out), jnp.float32, -bound, bound)
        b = jax.random.uniform(kb, (1, fan_out), jnp.float32, -bound, bound)
        params += [w, b]
    return tuple(params)


if __name__ == "__main__":
    batch_size = 8
    latent_size = 32
    image_size = 16

    key = jax.random.PRNGKey(0)
    key, kx = jax.random.split(key)
    # module's forward does input.view(batch_size, -1); supply latent already flat
    x = jax.random.normal(kx, (batch_size, latent_size), jnp.float32)
    params = init_params(key, latent_size, image_size)

    # one-time weight preprocessing (outside the hot path)
    prepped = jax.block_until_ready(prepare_params(params, image_size))

    out = fc_data_generator(x, prepped, image_size)
    out = jax.block_until_ready(out)
    assert out.shape == (batch_size, 1, image_size, image_size), out.shape
    assert bool(jnp.all(jnp.isfinite(out)))

    # correctness vs f32 reference (bf16 weights -> ~1e-2-level deltas expected)
    ref = fc_data_generator_ref(x, params, image_size)
    assert np.allclose(np.asarray(out), np.asarray(ref), atol=5e-2), (
        float(jnp.max(jnp.abs(out - ref)))
    )

    # also exercise the non-lane-aligned / partial-last-tile path
    # (out_dim = 784 -> padded to 896, tiles of 512: second tile has 384 valid cols)
    image_size2 = 28
    key, k2 = jax.random.split(key)
    params2 = init_params(k2, latent_size, image_size2)
    prepped2 = prepare_params(params2, image_size2)
    out2 = jax.block_until_ready(
        fc_data_generator(x, prepped2, image_size2, tile_n=512)
    )
    ref2 = fc_data_generator_ref(x, params2, image_size2)
    assert out2.shape == (batch_size, 1, image_size2, image_size2), out2.shape
    assert np.allclose(np.asarray(out2), np.asarray(ref2), atol=5e-2)

    print("KERNEL_OK")
</pallas_src>

<mosaic_0001>
module attributes {stable_mosaic.version = 11 : i64} {
  func.func @_mlp_kernel(%arg0: i32, %arg1: memref<8x32xbf16, #tpu.memory_space<vmem>>, %arg2: memref<32x256xbf16, #tpu.memory_space<vmem>>, %arg3: memref<1x256xf32, #tpu.memory_space<vmem>>, %arg4: memref<256x512xbf16, #tpu.memory_space<vmem>>, %arg5: memref<1x512xf32, #tpu.memory_space<vmem>>, %arg6: memref<512x128xbf16, #tpu.memory_space<vmem>>, %arg7: memref<1x128xf32, #tpu.memory_space<vmem>>, %arg8: memref<8x128xf32, #tpu.memory_space<vmem>>) attributes {dimension_semantics = [#tpu.dimension_semantics<parallel>], iteration_bounds = array<i64: 2>, scalar_prefetch = 0 : i64, scratch_operands = 0 : i64, tpu.core_type = #tpu.core_type<tc>, window_params = [{pipeline_mode = #tpu.pipeline_mode<synchronous>, transform_indices = @transform_0, window_bounds = array<i64: 8, 32>}, {pipeline_mode = #tpu.pipeline_mode<synchronous>, transform_indices = @transform_1, window_bounds = array<i64: 32, 256>}, {pipeline_mode = #tpu.pipeline_mode<synchronous>, transform_indices = @transform_2, window_bounds = array<i64: 1, 256>}, {pipeline_mode = #tpu.pipeline_mode<synchronous>, transform_indices = @transform_3, window_bounds = array<i64: 256, 512>}, {pipeline_mode = #tpu.pipeline_mode<synchronous>, transform_indices = @transform_4, window_bounds = array<i64: 1, 512>}, {transform_indices = @transform_5, window_bounds = array<i64: 512, 128>}, {transform_indices = @transform_6, window_bounds = array<i64: 1, 128>}, {transform_indices = @transform_7, window_bounds = array<i64: 8, 128>}]} {
    %c0 = arith.constant 0 : index
    %c0_0 = arith.constant 0 : index
    %0 = vector.load %arg1[%c0, %c0_0] : memref<8x32xbf16, #tpu.memory_space<vmem>>, vector<8x32xbf16>
    %c0_1 = arith.constant 0 : index
    %c0_2 = arith.constant 0 : index
    %1 = vector.load %arg2[%c0_1, %c0_2] : memref<32x256xbf16, #tpu.memory_space<vmem>>, vector<32x256xbf16>
    %cst = arith.constant dense<0.000000e+00> : vector<8x256xf32>
    %2 = tpu.matmul %0, %1, %cst {dimension_numbers = #tpu.dot_dimension_numbers<[1], [0], [0], [1], [0, 0, 1, 1], [], []>} : vector<8x32xbf16>, vector<32x256xbf16>, vector<8x256xf32> -> vector<8x256xf32>
    %c0_3 = arith.constant 0 : index
    %c0_4 = arith.constant 0 : index
    %3 = vector.load %arg3[%c0_3, %c0_4] : memref<1x256xf32, #tpu.memory_space<vmem>>, vector<1x256xf32>
    %4 = vector.broadcast %3 : vector<1x256xf32> to vector<8x256xf32>
    %5 = arith.addf %2, %4 : vector<8x256xf32>
    %cst_5 = arith.constant 0.000000e+00 : f32
    %6 = vector.broadcast %cst_5 : f32 to vector<8x256xf32>
    %7 = arith.maximumf %5, %6 : vector<8x256xf32>
    %8 = arith.truncf %7 : vector<8x256xf32> to vector<8x256xbf16>
    %c0_6 = arith.constant 0 : index
    %c0_7 = arith.constant 0 : index
    %9 = vector.load %arg4[%c0_6, %c0_7] : memref<256x512xbf16, #tpu.memory_space<vmem>>, vector<256x512xbf16>
    %cst_8 = arith.constant dense<0.000000e+00> : vector<8x512xf32>
    %10 = tpu.matmul %8, %9, %cst_8 {dimension_numbers = #tpu.dot_dimension_numbers<[1], [0], [0], [1], [0, 0, 1, 1], [], []>} : vector<8x256xbf16>, vector<256x512xbf16>, vector<8x512xf32> -> vector<8x512xf32>
    %c0_9 = arith.constant 0 : index
    %c0_10 = arith.constant 0 : index
    %11 = vector.load %arg5[%c0_9, %c0_10] : memref<1x512xf32, #tpu.memory_space<vmem>>, vector<1x512xf32>
    %12 = vector.broadcast %11 : vector<1x512xf32> to vector<8x512xf32>
    %13 = arith.addf %10, %12 : vector<8x512xf32>
    %cst_11 = arith.constant 0.000000e+00 : f32
    %14 = vector.broadcast %cst_11 : f32 to vector<8x512xf32>
    %15 = arith.maximumf %13, %14 : vector<8x512xf32>
    %16 = arith.truncf %15 : vector<8x512xf32> to vector<8x512xbf16>
    %c0_12 = arith.constant 0 : index
    %c0_13 = arith.constant 0 : index
    %17 = vector.load %arg6[%c0_12, %c0_13] : memref<512x128xbf16, #tpu.memory_space<vmem>>, vector<512x128xbf16>
    %cst_14 = arith.constant dense<0.000000e+00> : vector<8x128xf32>
    %18 = tpu.matmul %16, %17, %cst_14 {dimension_numbers = #tpu.dot_dimension_numbers<[1], [0], [0], [1], [0, 0, 1, 1], [], []>} : vector<8x512xbf16>, vector<512x128xbf16>, vector<8x128xf32> -> vector<8x128xf32>
    %c0_15 = arith.constant 0 : index
    %c0_16 = arith.constant 0 : index
    %19 = vector.load %arg7[%c0_15, %c0_16] : memref<1x128xf32, #tpu.memory_space<vmem>>, vector<1x128xf32>
    %20 = vector.broadcast %19 : vector<1x128xf32> to vector<8x128xf32>
    %21 = arith.addf %18, %20 : vector<8x128xf32>
    %22 = arith.negf %21 : vector<8x128xf32>
    %23 = math.exp %22 : vector<8x128xf32>
    %cst_17 = arith.constant 1.000000e+00 : f32
    %24 = vector.broadcast %cst_17 : f32 to vector<8x128xf32>
    %25 = arith.addf %24, %23 : vector<8x128xf32>
    %26 = arith.divf %24, %25 : vector<8x128xf32>
    %c0_18 = arith.constant 0 : index
    %c0_19 = arith.constant 0 : index
    %27 = vector.load %arg8[%c0_18, %c0_19] : memref<8x128xf32, #tpu.memory_space<vmem>>, vector<8x128xf32>
    tpu.vector_store %arg8[%c0_18, %c0_19], %26 {strides = array<i32>} : memref<8x128xf32, #tpu.memory_space<vmem>>, vector<8x128xf32>,
    return
  }
  func.func @transform_0(%arg0: i32) -> (i32, i32) {
    %c0_i32 = arith.constant 0 : i32
    %c0_i32_0 = arith.constant 0 : i32
    %c0_i32_1 = arith.constant 0 : i32
    return %c0_i32, %c0_i32_0 : i32, i32
  }
  func.func @transform_1(%arg0: i32) -> (i32, i32) {
    %c0_i32 = arith.constant 0 : i32
    %c0_i32_0 = arith.constant 0 : i32
    %c0_i32_1 = arith.constant 0 : i32
    return %c0_i32, %c0_i32_0 : i32, i32
  }
  func.func @transform_2(%arg0: i32) -> (i32, i32) {
    %c0_i32 = arith.constant 0 : i32
    %c0_i32_0 = arith.constant 0 : i32
    %c0_i32_1 = arith.constant 0 : i32
    return %c0_i32, %c0_i32_0 : i32, i32
  }
  func.func @transform_3(%arg0: i32) -> (i32, i32) {
    %c0_i32 = arith.constant 0 : i32
    %c0_i32_0 = arith.constant 0 : i32
    %c0_i32_1 = arith.constant 0 : i32
    return %c0_i32, %c0_i32_0 : i32, i32
  }
  func.func @transform_4(%arg0: i32) -> (i32, i32) {
    %c0_i32 = arith.constant 0 : i32
    %c0_i32_0 = arith.constant 0 : i32
    %c0_i32_1 = arith.constant 0 : i32
    return %c0_i32, %c0_i32_0 : i32, i32
  }
  func.func @transform_5(%arg0: i32) -> (i32, i32) {
    %c0_i32 = arith.constant 0 : i32
    %c0_i32_0 = arith.constant 0 : i32
    return %c0_i32, %arg0 : i32, i32
  }
  func.func @transform_6(%arg0: i32) -> (i32, i32) {
    %c0_i32 = arith.constant 0 : i32
    %c0_i32_0 = arith.constant 0 : i32
    return %c0_i32, %arg0 : i32, i32
  }
  func.func @transform_7(%arg0: i32) -> (i32, i32) {
    %c0_i32 = arith.constant 0 : i32
    %c0_i32_0 = arith.constant 0 : i32
    return %c0_i32, %arg0 : i32, i32
  }
}

</mosaic_0001>

<llo_original>
// kernel: fc_data_generator.1
$region0: #{fc_data_generator.1}
  #allocation0 [shape = 'u32[]', space=smem, size = 0x4, offset = 0x4, fixed_abs, tag = 'smem constant byte address 0x4 - core index']
  #allocation1 [shape = 'u32[144,128]{1,0:T(1,128)}', space=vmem, size = 0x12000, scoped, tag = 'internal scratch']
  %s0 = inlined_call_operand.vmem [shape: bf16[8,32], index: 0, kind: input, shape index: {}]
  %s1 = inlined_call_operand.hbm [shape: bf16[32,256], index: 1, kind: input, shape index: {}]
  %s2 = inlined_call_operand.vmem [shape: f32[1,256], index: 2, kind: input, shape index: {}]
  %s3 = inlined_call_operand.hbm [shape: bf16[256,512], index: 3, kind: input, shape index: {}]
  %s4 = inlined_call_operand.vmem [shape: f32[1,512], index: 4, kind: input, shape index: {}]
  %s5 = inlined_call_operand.hbm [shape: bf16[512,256], index: 5, kind: input, shape index: {}]
  %s6 = inlined_call_operand.vmem [shape: f32[1,256], index: 6, kind: input, shape index: {}]
  %s7 = inlined_call_operand.vmem [shape: f32[8,256], index: 7, kind: output, shape index: {}]
  %s8 = sld [smem:[#allocation0]]
  $region73: #{fc_data_generator.1} parent=0
    _
  %s10 = ssub.s32 1, %s8
  %s11 = scalar_select 0, %s10, %s8
  $region1: #{fc_data_generator.1} parent=0
    #allocation2 [shape = 'u8[16384]{0}', space=vmem, size = 0x4000, scoped, tag = 'input window, operand 1, single buffered']
    #allocation3 [shape = 's32[2]{0}', space=sflag, size = 0x8, scoped, tag = 'scoped memory for fc_data_generator.1']
    #allocation4 [shape = 'u8[262144]{0}', space=vmem, size = 0x40000, scoped, tag = 'input window, operand 3, single buffered']
    #allocation5 [shape = 's32[1]{0}', space=sflag, size = 0x4, scoped, tag = 'scoped memory for fc_data_generator.1']
    #allocation6 [shape = 'u8[262144]{0}', space=vmem, size = 0x40000, scoped, tag = 'input window, operand 5']
    %12 = vsyncpa [#allocation3], 0
    %13 = vsyncpa [#allocation5], 0
    loop: start=0, step=1, limit=4
    $region2: #{fc_data_generator.1} parent=1 // loop_pre_header
      _
    $region3: #{fc_data_generator.1} parent=1 // loop_header
      %s15 = sphi 0, %s19
      %p16 = scmp.ge.s32.totalorder %s15, 4
      %s23 = sphi 0, %s23
      %s25 = sphi 0, %s23
      %s26 = sphi 0, %s25
      %s40 = sphi 0, %s26
      %s44 = sphi 0, %s44
      %s46 = sphi 0, %s44
      %s47 = sphi 0, %s46
      %s61 = sphi 0, %s47
      %s65 = sphi 0, %s65
      %s67 = sphi 0, %s65
      %s68 = sphi 0, %s67
      %s82 = sphi 0, %s68
      %s86 = sphi 0, %s86
      %s88 = sphi 0, %s86
      %s89 = sphi 0, %s88
      %s103 = sphi 0, %s89
      %s107 = sphi 0, %s107
      %s109 = sphi 0, %s107
      %s110 = sphi 0, %s109
      %s124 = sphi 0, %s110
      %s130 = sphi 0, %s132
      %s133 = sphi 0, %s130
      %s134 = sphi 0, %s133
      %s150 = sphi 0, %s134
      %s156 = sphi 0, %s158
      %s159 = sphi 0, %s156
      %s160 = sphi 0, %s159
      %s176 = sphi 0, %s160
      %s182 = sphi 0, %s184
      %s185 = sphi 0, %s182
      %s186 = sphi 0, %s185
      %s202 = sphi 0, %s186
    $region4: #{fc_data_generator.1} parent=1 // loop_header_branch
      %18 = sbr.rel (%p16) target = $region8
    $region5: #{fc_data_generator.1} parent=1 // loop_body
      %s20 = ssub.s32 %s15, 1
      %s21 = ssub.s32 %s15, 2
      %s22 = sadd.s32 %s15, 1
      %s24 = sadd.s32 %s23, 1
      %p27 = scmp.eq.s32.totalorder %s15, 1
      %p28 = scmp.ne.s32.totalorder %s23, %s25
      %p29 = scmp.eq.s32.totalorder %s15, 0
      %p30 = por %p28, %p29
      %p31 = scmp.ne.s32.totalorder %s23, %s25
      %p32 = scmp.eq.s32.totalorder %s20, 1
      %p33 = por %p31, %p32
      %p34 = scmp.ne.s32.totalorder %s25, %s26
      %p35 = scmp.eq.s32.totalorder %s20, 0
      %p36 = por %p34, %p35
      %p37 = scmp.ne.s32.totalorder %s25, %s26
      %p38 = scmp.eq.s32.totalorder %s21, 1
      %p39 = por %p37, %p38
      %p41 = scmp.ne.s32.totalorder %s26, %s40
      %p42 = scmp.eq.s32.totalorder %s21, 0
      %p43 = por %p41, %p42
      %s45 = sadd.s32 %s44, 1
      %p48 = scmp.eq.s32.totalorder %s15, 1
      %p49 = scmp.ne.s32.totalorder %s44, %s46
      %p50 = scmp.eq.s32.totalorder %s15, 0
      %p51 = por %p49, %p50
      %p52 = scmp.ne.s32.totalorder %s44, %s46
      %p53 = scmp.eq.s32.totalorder %s20, 1
      %p54 = por %p52, %p53
      %p55 = scmp.ne.s32.totalorder %s46, %s47
      %p56 = scmp.eq.s32.totalorder %s20, 0
      %p57 = por %p55, %p56
      %p58 = scmp.ne.s32.totalorder %s46, %s47
      %p59 = scmp.eq.s32.totalorder %s21, 1
      %p60 = por %p58, %p59
      %p62 = scmp.ne.s32.totalorder %s47, %s61
      %p63 = scmp.eq.s32.totalorder %s21, 0
      %p64 = por %p62, %p63
      %s66 = sadd.s32 %s65, 1
      %p69 = scmp.eq.s32.totalorder %s15, 1
      %p70 = scmp.ne.s32.totalorder %s65, %s67
      %p71 = scmp.eq.s32.totalorder %s15, 0
      %p72 = por %p70, %p71
      %p73 = scmp.ne.s32.totalorder %s65, %s67
      %p74 = scmp.eq.s32.totalorder %s20, 1
      %p75 = por %p73, %p74
      %p76 = scmp.ne.s32.totalorder %s67, %s68
      %p77 = scmp.eq.s32.totalorder %s20, 0
      %p78 = por %p76, %p77
      %p79 = scmp.ne.s32.totalorder %s67, %s68
      %p80 = scmp.eq.s32.totalorder %s21, 1
      %p81 = por %p79, %p80
      %p83 = scmp.ne.s32.totalorder %s68, %s82
      %p84 = scmp.eq.s32.totalorder %s21, 0
      %p85 = por %p83, %p84
      %s87 = sadd.s32 %s86, 1
      %p90 = scmp.eq.s32.totalorder %s15, 1
      %p91 = scmp.ne.s32.totalorder %s86, %s88
      %p92 = scmp.eq.s32.totalorder %s15, 0
      %p93 = por %p91, %p92
      %p94 = scmp.ne.s32.totalorder %s86, %s88
      %p95 = scmp.eq.s32.totalorder %s20, 1
      %p96 = por %p94, %p95
      %p97 = scmp.ne.s32.totalorder %s88, %s89
      %p98 = scmp.eq.s32.totalorder %s20, 0
      %p99 = por %p97, %p98
      %p100 = scmp.ne.s32.totalorder %s88, %s89
      %p101 = scmp.eq.s32.totalorder %s21, 1
      %p102 = por %p100, %p101
      %p104 = scmp.ne.s32.totalorder %s89, %s103
      %p105 = scmp.eq.s32.totalorder %s21, 0
      %p106 = por %p104, %p105
      %s108 = sadd.s32 %s107, 1
      %p111 = scmp.eq.s32.totalorder %s15, 1
      %p112 = scmp.ne.s32.totalorder %s107, %s109
      %p113 = scmp.eq.s32.totalorder %s15, 0
      %p114 = por %p112, %p113
      %p115 = scmp.ne.s32.totalorder %s107, %s109
      %p116 = scmp.eq.s32.totalorder %s20, 1
      %p117 = por %p115, %p116
      %p118 = scmp.ne.s32.totalorder %s109, %s110
      %p119 = scmp.eq.s32.totalorder %s20, 0
      %p120 = por %p118, %p119
      %p121 = scmp.ne.s32.totalorder %s109, %s110
      %p122 = scmp.eq.s32.totalorder %s21, 1
      %p123 = por %p121, %p122
      %p125 = scmp.ne.s32.totalorder %s110, %s124
      %p126 = scmp.eq.s32.totalorder %s21, 0
      %p127 = por %p125, %p126
      %s128 = ssub.s32 %s15, %s22
      %p129 = scmp.eq.s32.totalorder %s128, 0
      %s131 = sadd.s32 %s130, 1
      %s132 = scalar_select %p129, %s130, %s131
      %p135 = pneg %p129
      %p136 = scmp.eq.s32.totalorder %s15, 1
      %p137 = por %p135, %p136
      %p138 = scmp.ne.s32.totalorder %s130, %s133
      %p139 = scmp.eq.s32.totalorder %s15, 0
      %p140 = por %p138, %p139
      %p141 = scmp.ne.s32.totalorder %s130, %s133
      %p142 = scmp.eq.s32.totalorder %s20, 1
      %p143 = por %p141, %p142
      %p144 = scmp.ne.s32.totalorder %s133, %s134
      %p145 = scmp.eq.s32.totalorder %s20, 0
      %p146 = por %p144, %p145
      %p147 = scmp.ne.s32.totalorder %s133, %s134
      %p148 = scmp.eq.s32.totalorder %s21, 1
      %p149 = por %p147, %p148
      %p151 = scmp.ne.s32.totalorder %s134, %s150
      %p152 = scmp.eq.s32.totalorder %s21, 0
      %p153 = por %p151, %p152
      %s154 = ssub.s32 %s15, %s22
      %p155 = scmp.eq.s32.totalorder %s154, 0
      %s157 = sadd.s32 %s156, 1
      %s158 = scalar_select %p155, %s156, %s157
      %p161 = pneg %p155
      %p162 = scmp.eq.s32.totalorder %s15, 1
      %p163 = por %p161, %p162
      %p164 = scmp.ne.s32.totalorder %s156, %s159
      %p165 = scmp.eq.s32.totalorder %s15, 0
      %p166 = por %p164, %p165
      %p167 = scmp.ne.s32.totalorder %s156, %s159
      %p168 = scmp.eq.s32.totalorder %s20, 1
      %p169 = por %p167, %p168
      %p170 = scmp.ne.s32.totalorder %s159, %s160
      %p171 = scmp.eq.s32.totalorder %s20, 0
      %p172 = por %p170, %p171
      %p173 = scmp.ne.s32.totalorder %s159, %s160
      %p174 = scmp.eq.s32.totalorder %s21, 1
      %p175 = por %p173, %p174
      %p177 = scmp.ne.s32.totalorder %s160, %s176
      %p178 = scmp.eq.s32.totalorder %s21, 0
      %p179 = por %p177, %p178
      %s180 = ssub.s32 %s15, %s22
      %p181 = scmp.eq.s32.totalorder %s180, 0
      %s183 = sadd.s32 %s182, 1
      %s184 = scalar_select %p181, %s182, %s183
      %p187 = pneg %p181
      %p188 = scmp.eq.s32.totalorder %s15, 1
      %p189 = por %p187, %p188
      %p190 = scmp.ne.s32.totalorder %s182, %s185
      %p191 = scmp.eq.s32.totalorder %s15, 0
      %p192 = por %p190, %p191
      %p193 = scmp.ne.s32.totalorder %s182, %s185
      %p194 = scmp.eq.s32.totalorder %s20, 1
      %p195 = por %p193, %p194
      %p196 = scmp.ne.s32.totalorder %s185, %s186
      %p197 = scmp.eq.s32.totalorder %s20, 0
      %p198 = por %p196, %p197
      %p199 = scmp.ne.s32.totalorder %s185, %s186
      %p200 = scmp.eq.s32.totalorder %s21, 1
      %p201 = por %p199, %p200
      %p203 = scmp.ne.s32.totalorder %s186, %s202
      %p204 = scmp.eq.s32.totalorder %s21, 0
      %p205 = por %p203, %p204
      %p206 = scmp.le.s32.totalorder 1, %s15
      %p207 = scmp.lt.s32.totalorder %s15, 3
      %p208 = pnand %p206, %p207
      %p209 = pneg %p208
      // Predicated region
      $region9: #{fc_data_generator.1} parent=5 // pred_check
        _
      $region10: #{fc_data_generator.1} parent=5 // pred_check_branch
        %211 = sbr.rel (%p208) target = $region12
      $region11: #{fc_data_generator.1} parent=5 // pred_region
        %s212 = ssub.s32 %s15, 1
        // Predicated region
        $region13: #{fc_data_generator.1} parent=11 // pred_check
          %p213 = pneg %p36
        $region14: #{fc_data_generator.1} parent=11 // pred_check_branch
          %215 = sbr.rel (%p213) target = $region16
        $region15: #{fc_data_generator.1} parent=11 // pred_region
          _
        $region16: #{fc_data_generator.1} parent=11 // pred_fallthru
          _
        // Predicated region
        $region17: #{fc_data_generator.1} parent=11 // pred_check
          %p216 = pneg %p57
        $region18: #{fc_data_generator.1} parent=11 // pred_check_branch
          %218 = sbr.rel (%p216) target = $region20
        $region19: #{fc_data_generator.1} parent=11 // pred_region
          %s220 = ssub.s32 512, 512
          %221 = vsyncadd [#allocation3], %s220
          %s222 = sshll.u32 [#allocation2], 4
          %s223 = int_to_ptr.vmem [resolvable:$true] %s222
          %228 = dma.hbm_to_vmem [thread:$0]  %s1, 512, %s223, [#allocation3], 128, 128, 8
        $region20: #{fc_data_generator.1} parent=11 // pred_fallthru
          _
        // Predicated region
        $region21: #{fc_data_generator.1} parent=11 // pred_check
          %p229 = pneg %p78
        $region22: #{fc_data_generator.1} parent=11 // pred_check_branch
          %231 = sbr.rel (%p229) target = $region24
        $region23: #{fc_data_generator.1} parent=11 // pred_region
          _
        $region24: #{fc_data_generator.1} parent=11 // pred_fallthru
          _
        // Predicated region
        $region25: #{fc_data_generator.1} parent=11 // pred_check
          %p232 = pneg %p99
        $region26: #{fc_data_generator.1} parent=11 // pred_check_branch
          %234 = sbr.rel (%p232) target = $region28
        $region27: #{fc_data_generator.1} parent=11 // pred_region
          %s236 = ssub.s32 8192, 8192
          %237 = vsyncadd [#allocation5], %s236
          %s238 = sshll.u32 [#allocation4], 4
          %s239 = int_to_ptr.vmem [resolvable:$true] %s238
          %244 = dma.hbm_to_vmem [thread:$0]  %s3, 8192, %s239, [#allocation5], 256, 256, 16
        $region28: #{fc_data_generator.1} parent=11 // pred_fallthru
          _
        // Predicated region
        $region29: #{fc_data_generator.1} parent=11 // pred_check
          %p245 = pneg %p120
        $region30: #{fc_data_generator.1} parent=11 // pred_check_branch
          %247 = sbr.rel (%p245) target = $region32
        $region31: #{fc_data_generator.1} parent=11 // pred_region
          _
        $region32: #{fc_data_generator.1} parent=11 // pred_fallthru
          _
      $region12: #{fc_data_generator.1} parent=5 // pred_fallthru
        _
      %p248 = scmp.lt.s32.totalorder %s15, 2
      // Predicated region
      $region33: #{fc_data_generator.1} parent=5 // pred_check
        %p249 = pneg %p248
      $region34: #{fc_data_generator.1} parent=5 // pred_check_branch
        %251 = sbr.rel (%p249) target = $region36
      $region35: #{fc_data_generator.1} parent=5 // pred_region
        // Predicated region
        $region37: #{fc_data_generator.1} parent=35 // pred_check
          %p252 = pneg %p140
        $region38: #{fc_data_generator.1} parent=35 // pred_check_branch
          %254 = sbr.rel (%p252) target = $region40
        $region39: #{fc_data_generator.1} parent=35 // pred_region
          %s255 = sand.u32 %s15, 1
          %s256 = scalar_lea.sflag [#allocation3], %s255
          %s257 = sand.u32 %s130, 1
          %s258 = smul.addr %s257, 256
          %s259 = scalar_lea.vmem [#allocation6], %s258
          %s261 = ssub.s32 4096, 4096
          %262 = vsyncadd %s256, %s261
          %s263 = smul.addr %s15, 64
          %s264 = scalar_lea.hbm %s5, %s263
          %s265 = sshll.u32 %s259, 4
          %s266 = int_to_ptr.vmem [resolvable:$true] %s265
          %271 = dma.hbm_to_vmem [thread:$0]  %s264, 4096, %s266, %s256, 128, 64, 4
        $region40: #{fc_data_generator.1} parent=35 // pred_fallthru
          _
        // Predicated region
        $region41: #{fc_data_generator.1} parent=35 // pred_check
          %p272 = pneg %p166
        $region42: #{fc_data_generator.1} parent=35 // pred_check_branch
          %274 = sbr.rel (%p272) target = $region44
        $region43: #{fc_data_generator.1} parent=35 // pred_region
          %p275 = scmp.lt.s32.totalorder %s15, 1
          %s276 = scalar_select %p275, %s15, 1
          %s277 = scalar_lea.vmem %s6, %s276
        $region44: #{fc_data_generator.1} parent=35 // pred_fallthru
          _
      $region36: #{fc_data_generator.1} parent=5 // pred_fallthru
        _
      %p278 = scmp.le.s32.totalorder 1, %s15
      %p279 = scmp.lt.s32.totalorder %s15, 3
      %p280 = pnand %p278, %p279
      %p281 = pneg %p280
      // Predicated region
      $region45: #{fc_data_generator.1} parent=5 // pred_check
        _
      $region46: #{fc_data_generator.1} parent=5 // pred_check_branch
        %283 = sbr.rel (%p280) target = $region48
      $region47: #{fc_data_generator.1} parent=5 // pred_region
        %s284 = ssub.s32 %s15, 1
        // Predicated region
        $region49: #{fc_data_generator.1} parent=47 // pred_check
          %p285 = pneg %p57
        $region50: #{fc_data_generator.1} parent=47 // pred_check_branch
          %287 = sbr.rel (%p285) target = $region52
        $region51: #{fc_data_generator.1} parent=47 // pred_region
          %288 = dma.done [#allocation3], 512
        $region52: #{fc_data_generator.1} parent=47 // pred_fallthru
          _
        // Predicated region
        $region53: #{fc_data_generator.1} parent=47 // pred_check
          %p289 = pneg %p99
        $region54: #{fc_data_generator.1} parent=47 // pred_check_branch
          %291 = sbr.rel (%p289) target = $region56
        $region55: #{fc_data_generator.1} parent=47 // pred_region
          %292 = dma.done [#allocation5], 8192
        $region56: #{fc_data_generator.1} parent=47 // pred_fallthru
          _
        %s293 = sand.u32 %s20, 1
        %s294 = scalar_lea.sflag [#allocation3], %s293
        %s295 = sand.u32 %s133, 1
        %s296 = smul.addr %s295, 256
        %s297 = scalar_lea.vmem [#allocation6], %s296
        // Predicated region
        $region57: #{fc_data_generator.1} parent=47 // pred_check
          %p298 = pneg %p146
        $region58: #{fc_data_generator.1} parent=47 // pred_check_branch
          %300 = sbr.rel (%p298) target = $region60
        $region59: #{fc_data_generator.1} parent=47 // pred_region
          %301 = dma.done %s294, 4096
        $region60: #{fc_data_generator.1} parent=47 // pred_fallthru
          _
        %p302 = pneg %p36
        %p303 = pneg %p33
        %p304 = pneg %p57
        %p305 = pneg %p54
        %p306 = pneg %p78
        %p307 = pneg %p75
        %p308 = pneg %p99
        %p309 = pneg %p96
        %p310 = pneg %p120
        %p311 = pneg %p117
        %s312 = sand.u32 %s20, 1
        %s313 = scalar_lea.sflag [#allocation3], %s312
        %s314 = sand.u32 %s133, 1
        %s315 = smul.addr %s314, 256
        %s316 = scalar_lea.vmem [#allocation6], %s315
        %p317 = pneg %p146
        %p318 = pneg %p143
        %p319 = scmp.lt.s32.totalorder %s20, 1
        %s320 = scalar_select %p319, %s20, 1
        %s321 = scalar_lea.vmem %s6, %s320
        %p322 = pneg %p172
        %p323 = pneg %p169
        %p324 = pneg %p198
        %p325 = pneg %p195
        %p326 = scmp.lt.s32.totalorder %s20, 1
        %s327 = scalar_select %p326, %s20, 1
        %s328 = smul.addr %s327, 8
        %s329 = scalar_lea.vmem %s7, %s328
        %p330 = scmp.lt.s32.totalorder %s20, 1
        %s331 = scalar_select %p330, %s20, 1
        %s332 = scalar_lea.vmem %s6, %s331
        %p333 = scmp.lt.s32.totalorder %s20, 1
        %s334 = scalar_select %p333, %s20, 1
        %s335 = smul.addr %s334, 8
        %s336 = scalar_lea.vmem %s7, %s335
        %v338 = vld [vmem:[%s0] sm:$0xf]
        %v339 = vld [vmem:[#allocation2] sm:$0xff]
        %v340 = vld [vmem:[#allocation2 + $0x8] sm:$0xff]
        %v341 = vld [vmem:[#allocation2 + $0x10] sm:$0xff]
        %v342 = vld [vmem:[#allocation2 + $0x18] sm:$0xff]
        %v343 = vld [vmem:[%s2] sm:$0x3]
        %v345 = vlaneseq
        %v346 = vshrl.u32 %v345, 7
        %v347 = vsub.s32 0, %v346
        %v348 = vrot.slane %v343, %v347
        %v349 = vlaneseq
        %v350 = vshrl.u32 %v349, 7
        %v351 = vsub.s32 1, %v350
        %v352 = vrot.slane %v343, %v351
        %v359 = vunpack.c.l.b16 %v339
        %v360 = vunpack.c.h.b16 %v339
        %v361 = vunpack.c.l.b16 %v340
        %v362 = vunpack.c.h.b16 %v340
        %v363 = vunpack.c.l.b16 %v341
        %v364 = vunpack.c.h.b16 %v341
        %v365 = vunpack.c.l.b16 %v342
        %v366 = vunpack.c.h.b16 %v342
        %v367 = vpack.c.b16 %v361, %v359
        %v368 = vpack.c.b16 %v362, %v360
        %v369 = vpack.c.b16 %v365, %v363
        %v370 = vpack.c.b16 %v366, %v364
        %vm375 = vcmask 261120
        %v377 = vsel %vm375, %v338, 0
        %379 = vmatprep.subr.bf16.mxu0 %v368
        %380 = vmatpush1.bf16.msra.mxu0 %v367
        %381 = vmatprep.subr.bf16.mxu0 %v370
        %382 = vmatpush1.bf16.msra.mxu0 %v369
        %383 = vmatprep.subr.bf16.mxu0 0
        %384 = vmatpush1.bf16.msra.mxu0 0
        %385 = vmatprep.subr.bf16.mxu0 0
        %386 = vmatpush1.bf16.msra.mxu0 0
        %387 = vmatprep.subr.bf16.mxu0 0
        %388 = vmatpush1.bf16.msra.mxu0 0
        %389 = vmatprep.subr.bf16.mxu0 0
        %390 = vmatpush1.bf16.msra.mxu0 0
        %391 = vmatprep.subr.bf16.mxu0 0
        %392 = vmatpush1.bf16.msra.mxu0 0
        %393 = vmatprep.subr.bf16.mxu0 0
        %394 = vmatpush1.bf16.msra.mxu0 0
        %395 = vmatprep.subr.bf16.mxu0 0
        %396 = vmatpush1.bf16.msra.mxu0 0
        %397 = vmatprep.subr.bf16.mxu0 0
        %398 = vmatpush1.bf16.msra.mxu0 0
        %399 = vmatprep.subr.bf16.mxu0 0
        %400 = vmatpush1.bf16.msra.mxu0 0
        %401 = vmatprep.subr.bf16.mxu0 0
        %402 = vmatpush1.bf16.msra.mxu0 0
        %403 = vmatprep.subr.bf16.mxu0 0
        %404 = vmatpush1.bf16.msra.mxu0 0
        %405 = vmatprep.subr.bf16.mxu0 0
        %406 = vmatpush1.bf16.msra.mxu0 0
        %407 = vmatprep.subr.bf16.mxu0 0
        %408 = vmatpush1.bf16.msra.mxu0 0
        %409 = vmatprep.subr.bf16.mxu0 0
        %410 = vmatpush1.bf16.msra.mxu0 0
        %411 = vmatprep.mubr.bf16.mxu0 0
        %412 = vmatmul.mubr.bf16.gmra.mrb[0].mxu0 %v377
        %v413 = vpop.f32.mrb[0].mxu0
        %v414 = vadd.f32 %v348, %v413
        %v415 = vpop.f32.mrb[0].mxu0
        %v416 = vadd.f32 %v352, %v415
        %v417 = vpop.f32.mrb[0].mxu0
        %v418 = vpop.f32.mrb[0].mxu0
        %419 = vdwg.mxu0
        %v420 = vmax.f32 %v414, 0.0
        %v421 = vmax.f32 %v416, 0.0
        %v422 = vpack.c.bf16 %v420, %v420
        %v423 = vpack.c.bf16 %v421, %v421
        %v424 = vld [vmem:[#allocation4] sm:$0xff]
        %v425 = vld [vmem:[#allocation4 + $0x8] sm:$0xff]
        %v426 = vld [vmem:[#allocation4 + $0x10] sm:$0xff]
        %v427 = vld [vmem:[#allocation4 + $0x18] sm:$0xff]
        %v428 = vld [vmem:[#allocation4 + $0x20] sm:$0xff]
        %v429 = vld [vmem:[#allocation4 + $0x28] sm:$0xff]
        %v430 = vld [vmem:[#allocation4 + $0x30] sm:$0xff]
        %v431 = vld [vmem:[#allocation4 + $0x38] sm:$0xff]
        %v432 = vld [vmem:[#allocation4 + $0x40] sm:$0xff]
        %v433 = vld [vmem:[#allocation4 + $0x48] sm:$0xff]
        %v434 = vld [vmem:[#allocation4 + $0x50] sm:$0xff]
        %v435 = vld [vmem:[#allocation4 + $0x58] sm:$0xff]
        %v436 = vld [vmem:[#allocation4 + $0x60] sm:$0xff]
        %v437 = vld [vmem:[#allocation4 + $0x68] sm:$0xff]
        %v438 = vld [vmem:[#allocation4 + $0x70] sm:$0xff]
        %v439 = vld [vmem:[#allocation4 + $0x78] sm:$0xff]
        %v440 = vld [vmem:[#allocation4 + $0x80] sm:$0xff]
        %v441 = vld [vmem:[#allocation4 + $0x88] sm:$0xff]
        %v442 = vld [vmem:[#allocation4 + $0x90] sm:$0xff]
        %v443 = vld [vmem:[#allocation4 + $0x98] sm:$0xff]
        %v444 = vld [vmem:[#allocation4 + $0xa0] sm:$0xff]
        %v445 = vld [vmem:[#allocation4 + $0xa8] sm:$0xff]
        %v446 = vld [vmem:[#allocation4 + $0xb0] sm:$0xff]
        %v447 = vld [vmem:[#allocation4 + $0xb8] sm:$0xff]
        %v448 = vld [vmem:[#allocation4 + $0xc0] sm:$0xff]
        %v449 = vld [vmem:[#allocation4 + $0xc8] sm:$0xff]
        %v450 = vld [vmem:[#allocation4 + $0xd0] sm:$0xff]
        %v451 = vld [vmem:[#allocation4 + $0xd8] sm:$0xff]
        %v452 = vld [vmem:[#allocation4 + $0xe0] sm:$0xff]
        %v453 = vld [vmem:[#allocation4 + $0xe8] sm:$0xff]
        %v454 = vld [vmem:[#allocation4 + $0xf0] sm:$0xff]
        %v455 = vld [vmem:[#allocation4 + $0xf8] sm:$0xff]
        %v456 = vld [vmem:[#allocation4 + $0x100] sm:$0xff]
        %v457 = vld [vmem:[#allocation4 + $0x108] sm:$0xff]
        %v458 = vld [vmem:[#allocation4 + $0x110] sm:$0xff]
        %v459 = vld [vmem:[#allocation4 + $0x118] sm:$0xff]
        %v460 = vld [vmem:[#allocation4 + $0x120] sm:$0xff]
        %v461 = vld [vmem:[#allocation4 + $0x128] sm:$0xff]
        %v462 = vld [vmem:[#allocation4 + $0x130] sm:$0xff]
        %v463 = vld [vmem:[#allocation4 + $0x138] sm:$0xff]
        %v464 = vld [vmem:[#allocation4 + $0x140] sm:$0xff]
        %v465 = vld [vmem:[#allocation4 + $0x148] sm:$0xff]
        %v466 = vld [vmem:[#allocation4 + $0x150] sm:$0xff]
        %v467 = vld [vmem:[#allocation4 + $0x158] sm:$0xff]
        %v468 = vld [vmem:[#allocation4 + $0x160] sm:$0xff]
        %v469 = vld [vmem:[#allocation4 + $0x168] sm:$0xff]
        %v470 = vld [vmem:[#allocation4 + $0x170] sm:$0xff]
        %v471 = vld [vmem:[#allocation4 + $0x178] sm:$0xff]
        %v472 = vld [vmem:[#allocation4 + $0x180] sm:$0xff]
        %v473 = vld [vmem:[#allocation4 + $0x188] sm:$0xff]
        %v474 = vld [vmem:[#allocation4 + $0x190] sm:$0xff]
        %v475 = vld [vmem:[#allocation4 + $0x198] sm:$0xff]
        %v476 = vld [vmem:[#allocation4 + $0x1a0] sm:$0xff]
        %v477 = vld [vmem:[#allocation4 + $0x1a8] sm:$0xff]
        %v478 = vld [vmem:[#allocation4 + $0x1b0] sm:$0xff]
        %v479 = vld [vmem:[#allocation4 + $0x1b8] sm:$0xff]
        %v480 = vld [vmem:[#allocation4 + $0x1c0] sm:$0xff]
        %v481 = vld [vmem:[#allocation4 + $0x1c8] sm:$0xff]
        %v482 = vld [vmem:[#allocation4 + $0x1d0] sm:$0xff]
        %v483 = vld [vmem:[#allocation4 + $0x1d8] sm:$0xff]
        %v484 = vld [vmem:[#allocation4 + $0x1e0] sm:$0xff]
        %v485 = vld [vmem:[#allocation4 + $0x1e8] sm:$0xff]
        %v486 = vld [vmem:[#allocation4 + $0x1f0] sm:$0xff]
        %v487 = vld [vmem:[#allocation4 + $0x1f8] sm:$0xff]
        %v488 = vld [vmem:[%s4] sm:$0xf]
        %v490 = vlaneseq
        %v491 = vshrl.u32 %v490, 7
        %v492 = vsub.s32 0, %v491
        %v493 = vrot.slane %v488, %v492
        %v494 = vlaneseq
        %v495 = vshrl.u32 %v494, 7
        %v496 = vsub.s32 1, %v495
        %v497 = vrot.slane %v488, %v496
        %v498 = vlaneseq
        %v499 = vshrl.u32 %v498, 7
        %v500 = vsub.s32 2, %v499
        %v501 = vrot.slane %v488, %v500
        %v502 = vlaneseq
        %v503 = vshrl.u32 %v502, 7
        %v504 = vsub.s32 3, %v503
        %v505 = vrot.slane %v488, %v504
        %v574 = vunpack.c.l.b16 %v424
        %v575 = vunpack.c.h.b16 %v424
        %v576 = vunpack.c.l.b16 %v425
        %v577 = vunpack.c.h.b16 %v425
        %v578 = vunpack.c.l.b16 %v426
        %v579 = vunpack.c.h.b16 %v426
        %v580 = vunpack.c.l.b16 %v427
        %v581 = vunpack.c.h.b16 %v427
        %v582 = vunpack.c.l.b16 %v428
        %v583 = vunpack.c.h.b16 %v428
        %v584 = vunpack.c.l.b16 %v429
        %v585 = vunpack.c.h.b16 %v429
        %v586 = vunpack.c.l.b16 %v430
        %v587 = vunpack.c.h.b16 %v430
        %v588 = vunpack.c.l.b16 %v431
        %v589 = vunpack.c.h.b16 %v431
        %v590 = vunpack.c.l.b16 %v432
        %v591 = vunpack.c.h.b16 %v432
        %v592 = vunpack.c.l.b16 %v433
        %v593 = vunpack.c.h.b16 %v433
        %v594 = vunpack.c.l.b16 %v434
        %v595 = vunpack.c.h.b16 %v434
        %v596 = vunpack.c.l.b16 %v435
        %v597 = vunpack.c.h.b16 %v435
        %v598 = vunpack.c.l.b16 %v436
        %v599 = vunpack.c.h.b16 %v436
        %v600 = vunpack.c.l.b16 %v437
        %v601 = vunpack.c.h.b16 %v437
        %v602 = vunpack.c.l.b16 %v438
        %v603 = vunpack.c.h.b16 %v438
        %v604 = vunpack.c.l.b16 %v439
        %v605 = vunpack.c.h.b16 %v439
        %v606 = vunpack.c.l.b16 %v440
        %v607 = vunpack.c.h.b16 %v440
        %v608 = vunpack.c.l.b16 %v441
        %v609 = vunpack.c.h.b16 %v441
        %v610 = vunpack.c.l.b16 %v442
        %v611 = vunpack.c.h.b16 %v442
        %v612 = vunpack.c.l.b16 %v443
        %v613 = vunpack.c.h.b16 %v443
        %v614 = vunpack.c.l.b16 %v444
        %v615 = vunpack.c.h.b16 %v444
        %v616 = vunpack.c.l.b16 %v445
        %v617 = vunpack.c.h.b16 %v445
        %v618 = vunpack.c.l.b16 %v446
        %v619 = vunpack.c.h.b16 %v446
        %v620 = vunpack.c.l.b16 %v447
        %v621 = vunpack.c.h.b16 %v447
        %v622 = vunpack.c.l.b16 %v448
        %v623 = vunpack.c.h.b16 %v448
        %v624 = vunpack.c.l.b16 %v449
        %v625 = vunpack.c.h.b16 %v449
        %v626 = vunpack.c.l.b16 %v450
        %v627 = vunpack.c.h.b16 %v450
        %v628 = vunpack.c.l.b16 %v451
        %v629 = vunpack.c.h.b16 %v451
        %v630 = vunpack.c.l.b16 %v452
        %v631 = vunpack.c.h.b16 %v452
        %v632 = vunpack.c.l.b16 %v453
        %v633 = vunpack.c.h.b16 %v453
        %v634 = vunpack.c.l.b16 %v454
        %v635 = vunpack.c.h.b16 %v454
        %v636 = vunpack.c.l.b16 %v455
        %v637 = vunpack.c.h.b16 %v455
        %v638 = vunpack.c.l.b16 %v456
        %v639 = vunpack.c.h.b16 %v456
        %v640 = vunpack.c.l.b16 %v457
        %v641 = vunpack.c.h.b16 %v457
        %v642 = vunpack.c.l.b16 %v458
        %v643 = vunpack.c.h.b16 %v458
        %v644 = vunpack.c.l.b16 %v459
        %v645 = vunpack.c.h.b16 %v459
        %v646 = vunpack.c.l.b16 %v460
        %v647 = vunpack.c.h.b16 %v460
        %v648 = vunpack.c.l.b16 %v461
        %v649 = vunpack.c.h.b16 %v461
        %v650 = vunpack.c.l.b16 %v462
        %v651 = vunpack.c.h.b16 %v462
        %v652 = vunpack.c.l.b16 %v463
        %v653 = vunpack.c.h.b16 %v463
        %v654 = vunpack.c.l.b16 %v464
        %v655 = vunpack.c.h.b16 %v464
        %v656 = vunpack.c.l.b16 %v465
        %v657 = vunpack.c.h.b16 %v465
        %v658 = vunpack.c.l.b16 %v466
        %v659 = vunpack.c.h.b16 %v466
        %v660 = vunpack.c.l.b16 %v467
        %v661 = vunpack.c.h.b16 %v467
        %v662 = vunpack.c.l.b16 %v468
        %v663 = vunpack.c.h.b16 %v468
        %v664 = vunpack.c.l.b16 %v469
        %v665 = vunpack.c.h.b16 %v469
        %v666 = vunpack.c.l.b16 %v470
        %v667 = vunpack.c.h.b16 %v470
        %v668 = vunpack.c.l.b16 %v471
        %v669 = vunpack.c.h.b16 %v471
        %v670 = vunpack.c.l.b16 %v472
        %v671 = vunpack.c.h.b16 %v472
        %v672 = vunpack.c.l.b16 %v473
        %v673 = vunpack.c.h.b16 %v473
        %v674 = vunpack.c.l.b16 %v474
        %v675 = vunpack.c.h.b16 %v474
        %v676 = vunpack.c.l.b16 %v475
        %v677 = vunpack.c.h.b16 %v475
        %v678 = vunpack.c.l.b16 %v476
        %v679 = vunpack.c.h.b16 %v476
        %v680 = vunpack.c.l.b16 %v477
        %v681 = vunpack.c.h.b16 %v477
        %v682 = vunpack.c.l.b16 %v478
        %v683 = vunpack.c.h.b16 %v478
        %v684 = vunpack.c.l.b16 %v479
        %v685 = vunpack.c.h.b16 %v479
        %v686 = vunpack.c.l.b16 %v480
        %v687 = vunpack.c.h.b16 %v480
        %v688 = vunpack.c.l.b16 %v481
        %v689 = vunpack.c.h.b16 %v481
        %v690 = vunpack.c.l.b16 %v482
        %v691 = vunpack.c.h.b16 %v482
        %v692 = vunpack.c.l.b16 %v483
        %v693 = vunpack.c.h.b16 %v483
        %v694 = vunpack.c.l.b16 %v484
        %v695 = vunpack.c.h.b16 %v484
        %v696 = vunpack.c.l.b16 %v485
        %v697 = vunpack.c.h.b16 %v485
        %v698 = vunpack.c.l.b16 %v486
        %v699 = vunpack.c.h.b16 %v486
        %v700 = vunpack.c.l.b16 %v487
        %v701 = vunpack.c.h.b16 %v487
        %v702 = vpack.c.b16 %v578, %v574
        %v703 = vpack.c.b16 %v579, %v575
        %v704 = vpack.c.b16 %v580, %v576
        %v705 = vpack.c.b16 %v581, %v577
        %v706 = vpack.c.b16 %v586, %v582
        %v707 = vpack.c.b16 %v587, %v583
        %v708 = vpack.c.b16 %v588, %v584
        %v709 = vpack.c.b16 %v589, %v585
        %v710 = vpack.c.b16 %v594, %v590
        %v711 = vpack.c.b16 %v595, %v591
        %v712 = vpack.c.b16 %v596, %v592
        %v713 = vpack.c.b16 %v597, %v593
        %v714 = vpack.c.b16 %v602, %v598
        %v715 = vpack.c.b16 %v603, %v599
        %v716 = vpack.c.b16 %v604, %v600
        %v717 = vpack.c.b16 %v605, %v601
        %v718 = vpack.c.b16 %v610, %v606
        %v719 = vpack.c.b16 %v611, %v607
        %v720 = vpack.c.b16 %v612, %v608
        %v721 = vpack.c.b16 %v613, %v609
        %v722 = vpack.c.b16 %v618, %v614
        %v723 = vpack.c.b16 %v619, %v615
        %v724 = vpack.c.b16 %v620, %v616
        %v725 = vpack.c.b16 %v621, %v617
        %v726 = vpack.c.b16 %v626, %v622
        %v727 = vpack.c.b16 %v627, %v623
        %v728 = vpack.c.b16 %v628, %v624
        %v729 = vpack.c.b16 %v629, %v625
        %v730 = vpack.c.b16 %v634, %v630
        %v731 = vpack.c.b16 %v635, %v631
        %v732 = vpack.c.b16 %v636, %v632
        %v733 = vpack.c.b16 %v637, %v633
        %v734 = vpack.c.b16 %v642, %v638
        %v735 = vpack.c.b16 %v643, %v639
        %v736 = vpack.c.b16 %v644, %v640
        %v737 = vpack.c.b16 %v645, %v641
        %v738 = vpack.c.b16 %v650, %v646
        %v739 = vpack.c.b16 %v651, %v647
        %v740 = vpack.c.b16 %v652, %v648
        %v741 = vpack.c.b16 %v653, %v649
        %v742 = vpack.c.b16 %v658, %v654
        %v743 = vpack.c.b16 %v659, %v655
        %v744 = vpack.c.b16 %v660, %v656
        %v745 = vpack.c.b16 %v661, %v657
        %v746 = vpack.c.b16 %v666, %v662
        %v747 = vpack.c.b16 %v667, %v663
        %v748 = vpack.c.b16 %v668, %v664
        %v749 = vpack.c.b16 %v669, %v665
        %v750 = vpack.c.b16 %v674, %v670
        %v751 = vpack.c.b16 %v675, %v671
        %v752 = vpack.c.b16 %v676, %v672
        %v753 = vpack.c.b16 %v677, %v673
        %v754 = vpack.c.b16 %v682, %v678
        %v755 = vpack.c.b16 %v683, %v679
        %v756 = vpack.c.b16 %v684, %v680
        %v757 = vpack.c.b16 %v685, %v681
        %v758 = vpack.c.b16 %v690, %v686
        %v759 = vpack.c.b16 %v691, %v687
        %v760 = vpack.c.b16 %v692, %v688
        %v761 = vpack.c.b16 %v693, %v689
        %v762 = vpack.c.b16 %v698, %v694
        %v763 = vpack.c.b16 %v699, %v695
        %v764 = vpack.c.b16 %v700, %v696
        %v765 = vpack.c.b16 %v701, %v697
        %830 = vmatprep.subr.bf16.mxu0 %v703
        %831 = vmatpush1.bf16.msra.mxu0 %v702
        %832 = vmatprep.subr.bf16.mxu0 %v707
        %833 = vmatpush1.bf16.msra.mxu0 %v706
        %834 = vmatprep.subr.bf16.mxu0 %v711
        %835 = vmatpush1.bf16.msra.mxu0 %v710
        %836 = vmatprep.subr.bf16.mxu0 %v715
        %837 = vmatpush1.bf16.msra.mxu0 %v714
        %838 = vmatprep.subr.bf16.mxu0 %v719
        %839 = vmatpush1.bf16.msra.mxu0 %v718
        %840 = vmatprep.subr.bf16.mxu0 %v723
        %841 = vmatpush1.bf16.msra.mxu0 %v722
        %842 = vmatprep.subr.bf16.mxu0 %v727
        %843 = vmatpush1.bf16.msra.mxu0 %v726
        %844 = vmatprep.subr.bf16.mxu0 %v731
        %845 = vmatpush1.bf16.msra.mxu0 %v730
        %846 = vmatprep.subr.bf16.mxu0 %v735
        %847 = vmatpush1.bf16.msra.mxu0 %v734
        %848 = vmatprep.subr.bf16.mxu0 %v739
        %849 = vmatpush1.bf16.msra.mxu0 %v738
        %850 = vmatprep.subr.bf16.mxu0 %v743
        %851 = vmatpush1.bf16.msra.mxu0 %v742
        %852 = vmatprep.subr.bf16.mxu0 %v747
        %853 = vmatpush1.bf16.msra.mxu0 %v746
        %854 = vmatprep.subr.bf16.mxu0 %v751
        %855 = vmatpush1.bf16.msra.mxu0 %v750
        %856 = vmatprep.subr.bf16.mxu0 %v755
        %857 = vmatpush1.bf16.msra.mxu0 %v754
        %858 = vmatprep.subr.bf16.mxu0 %v759
        %859 = vmatpush1.bf16.msra.mxu0 %v758
        %860 = vmatprep.subr.bf16.mxu0 %v763
        %861 = vmatpush1.bf16.msra.mxu0 %v762
        %862 = vmatprep.mubr.bf16.mxu0 %v423
        %863 = vmatmul.mubr.bf16.gmra.mrb[0].mxu0 %v422
        %v864 = vpop.f32.mrb[0].mxu0
        %v865 = vadd.f32 %v493, %v864
        %v866 = vpop.f32.mrb[0].mxu0
        %v867 = vadd.f32 %v497, %v866
        %v868 = vpop.f32.mrb[0].mxu0
        %v869 = vpop.f32.mrb[0].mxu0
        %870 = vdwg.mxu0
        %871 = vmatprep.subr.bf16.mxu0 %v705
        %872 = vmatpush1.bf16.msra.mxu0 %v704
        %873 = vmatprep.subr.bf16.mxu0 %v709
        %874 = vmatpush1.bf16.msra.mxu0 %v708
        %875 = vmatprep.subr.bf16.mxu0 %v713
        %876 = vmatpush1.bf16.msra.mxu0 %v712
        %877 = vmatprep.subr.bf16.mxu0 %v717
        %878 = vmatpush1.bf16.msra.mxu0 %v716
        %879 = vmatprep.subr.bf16.mxu0 %v721
        %880 = vmatpush1.bf16.msra.mxu0 %v720
        %881 = vmatprep.subr.bf16.mxu0 %v725
        %882 = vmatpush1.bf16.msra.mxu0 %v724
        %883 = vmatprep.subr.bf16.mxu0 %v729
        %884 = vmatpush1.bf16.msra.mxu0 %v728
        %885 = vmatprep.subr.bf16.mxu0 %v733
        %886 = vmatpush1.bf16.msra.mxu0 %v732
        %887 = vmatprep.subr.bf16.mxu0 %v737
        %888 = vmatpush1.bf16.msra.mxu0 %v736
        %889 = vmatprep.subr.bf16.mxu0 %v741
        %890 = vmatpush1.bf16.msra.mxu0 %v740
        %891 = vmatprep.subr.bf16.mxu0 %v745
        %892 = vmatpush1.bf16.msra.mxu0 %v744
        %893 = vmatprep.subr.bf16.mxu0 %v749
        %894 = vmatpush1.bf16.msra.mxu0 %v748
        %895 = vmatprep.subr.bf16.mxu0 %v753
        %896 = vmatpush1.bf16.msra.mxu0 %v752
        %897 = vmatprep.subr.bf16.mxu0 %v757
        %898 = vmatpush1.bf16.msra.mxu0 %v756
        %899 = vmatprep.subr.bf16.mxu0 %v761
        %900 = vmatpush1.bf16.msra.mxu0 %v760
        %901 = vmatprep.subr.bf16.mxu0 %v765
        %902 = vmatpush1.bf16.msra.mxu0 %v764
        %903 = vmatprep.mubr.bf16.mxu0 %v423
        %904 = vmatmul.mubr.bf16.gmra.mrb[0].mxu0 %v422
        %v905 = vpop.f32.mrb[0].mxu0
        %v906 = vadd.f32 %v501, %v905
        %v907 = vpop.f32.mrb[0].mxu0
        %v908 = vadd.f32 %v505, %v907
        %v909 = vpop.f32.mrb[0].mxu0
        %v910 = vpop.f32.mrb[0].mxu0
        %911 = vdwg.mxu0
        %v912 = vmax.f32 %v865, 0.0
        %v913 = vmax.f32 %v867, 0.0
        %v914 = vmax.f32 %v906, 0.0
        %v915 = vmax.f32 %v908, 0.0
        %v916 = vpack.c.bf16 %v912, %v912
        %v917 = vpack.c.bf16 %v913, %v913
        %v918 = vpack.c.bf16 %v914, %v914
        %v919 = vpack.c.bf16 %v915, %v915
        %v920 = vld [vmem:[%s297] sm:$0xf]
        %v921 = vld [vmem:[%s297 + $0x4] sm:$0xf]
        %v922 = vld [vmem:[%s297 + $0x8] sm:$0xf]
        %v923 = vld [vmem:[%s297 + $0xc] sm:$0xf]
        %v924 = vld [vmem:[%s297 + $0x10] sm:$0xf]
        %v925 = vld [vmem:[%s297 + $0x14] sm:$0xf]
        %v926 = vld [vmem:[%s297 + $0x18] sm:$0xf]
        %v927 = vld [vmem:[%s297 + $0x1c] sm:$0xf]
        %v928 = vld [vmem:[%s297 + $0x20] sm:$0xf]
        %v929 = vld [vmem:[%s297 + $0x24] sm:$0xf]
        %v930 = vld [vmem:[%s297 + $0x28] sm:$0xf]
        %v931 = vld [vmem:[%s297 + $0x2c] sm:$0xf]
        %v932 = vld [vmem:[%s297 + $0x30] sm:$0xf]
        %v933 = vld [vmem:[%s297 + $0x34] sm:$0xf]
        %v934 = vld [vmem:[%s297 + $0x38] sm:$0xf]
        %v935 = vld [vmem:[%s297 + $0x3c] sm:$0xf]
        %v936 = vld [vmem:[%s297 + $0x40] sm:$0xf]
        %v937 = vld [vmem:[%s297 + $0x44] sm:$0xf]
        %v938 = vld [vmem:[%s297 + $0x48] sm:$0xf]
        %v939 = vld [vmem:[%s297 + $0x4c] sm:$0xf]
        %v940 = vld [vmem:[%s297 + $0x50] sm:$0xf]
        %v941 = vld [vmem:[%s297 + $0x54] sm:$0xf]
        %v942 = vld [vmem:[%s297 + $0x58] sm:$0xf]
        %v943 = vld [vmem:[%s297 + $0x5c] sm:$0xf]
        %v944 = vld [vmem:[%s297 + $0x60] sm:$0xf]
        %v945 = vld [vmem:[%s297 + $0x64] sm:$0xf]
        %v946 = vld [vmem:[%s297 + $0x68] sm:$0xf]
        %v947 = vld [vmem:[%s297 + $0x6c] sm:$0xf]
        %v948 = vld [vmem:[%s297 + $0x70] sm:$0xf]
        %v949 = vld [vmem:[%s297 + $0x74] sm:$0xf]
        %v950 = vld [vmem:[%s297 + $0x78] sm:$0xf]
        %v951 = vld [vmem:[%s297 + $0x7c] sm:$0xf]
        %v952 = vld [vmem:[%s297 + $0x80] sm:$0xf]
        %v953 = vld [vmem:[%s297 + $0x84] sm:$0xf]
        %v954 = vld [vmem:[%s297 + $0x88] sm:$0xf]
        %v955 = vld [vmem:[%s297 + $0x8c] sm:$0xf]
        %v956 = vld [vmem:[%s297 + $0x90] sm:$0xf]
        %v957 = vld [vmem:[%s297 + $0x94] sm:$0xf]
        %v958 = vld [vmem:[%s297 + $0x98] sm:$0xf]
        %v959 = vld [vmem:[%s297 + $0x9c] sm:$0xf]
        %v960 = vld [vmem:[%s297 + $0xa0] sm:$0xf]
        %v961 = vld [vmem:[%s297 + $0xa4] sm:$0xf]
        %v962 = vld [vmem:[%s297 + $0xa8] sm:$0xf]
        %v963 = vld [vmem:[%s297 + $0xac] sm:$0xf]
        %v964 = vld [vmem:[%s297 + $0xb0] sm:$0xf]
        %v965 = vld [vmem:[%s297 + $0xb4] sm:$0xf]
        %v966 = vld [vmem:[%s297 + $0xb8] sm:$0xf]
        %v967 = vld [vmem:[%s297 + $0xbc] sm:$0xf]
        %v968 = vld [vmem:[%s297 + $0xc0] sm:$0xf]
        %v969 = vld [vmem:[%s297 + $0xc4] sm:$0xf]
        %v970 = vld [vmem:[%s297 + $0xc8] sm:$0xf]
        %v971 = vld [vmem:[%s297 + $0xcc] sm:$0xf]
        %v972 = vld [vmem:[%s297 + $0xd0] sm:$0xf]
        %v973 = vld [vmem:[%s297 + $0xd4] sm:$0xf]
        %v974 = vld [vmem:[%s297 + $0xd8] sm:$0xf]
        %v975 = vld [vmem:[%s297 + $0xdc] sm:$0xf]
        %v976 = vld [vmem:[%s297 + $0xe0] sm:$0xf]
        %v977 = vld [vmem:[%s297 + $0xe4] sm:$0xf]
        %v978 = vld [vmem:[%s297 + $0xe8] sm:$0xf]
        %v979 = vld [vmem:[%s297 + $0xec] sm:$0xf]
        %v980 = vld [vmem:[%s297 + $0xf0] sm:$0xf]
        %v981 = vld [vmem:[%s297 + $0xf4] sm:$0xf]
        %v982 = vld [vmem:[%s297 + $0xf8] sm:$0xf]
        %v983 = vld [vmem:[%s297 + $0xfc] sm:$0xf]
        %v984 = vld [vmem:[%s332] sm:$0x1]
        %v986 = vlaneseq
        %v987 = vshrl.u32 %v986, 7
        %v988 = vsub.s32 0, %v987
        %v989 = vrot.slane %v984, %v988
        %v1055 = vunpack.c.l.b16 %v920
        %v1056 = vunpack.c.l.b16 %v921
        %v1057 = vunpack.c.l.b16 %v922
        %v1058 = vunpack.c.l.b16 %v923
        %v1059 = vunpack.c.l.b16 %v924
        %v1060 = vunpack.c.l.b16 %v925
        %v1061 = vunpack.c.l.b16 %v926
        %v1062 = vunpack.c.l.b16 %v927
        %v1063 = vunpack.c.l.b16 %v928
        %v1064 = vunpack.c.l.b16 %v929
        %v1065 = vunpack.c.l.b16 %v930
        %v1066 = vunpack.c.l.b16 %v931
        %v1067 = vunpack.c.l.b16 %v932
        %v1068 = vunpack.c.l.b16 %v933
        %v1069 = vunpack.c.l.b16 %v934
        %v1070 = vunpack.c.l.b16 %v935
        %v1071 = vunpack.c.l.b16 %v936
        %v1072 = vunpack.c.l.b16 %v937
        %v1073 = vunpack.c.l.b16 %v938
        %v1074 = vunpack.c.l.b16 %v939
        %v1075 = vunpack.c.l.b16 %v940
        %v1076 = vunpack.c.l.b16 %v941
        %v1077 = vunpack.c.l.b16 %v942
        %v1078 = vunpack.c.l.b16 %v943
        %v1079 = vunpack.c.l.b16 %v944
        %v1080 = vunpack.c.l.b16 %v945
        %v1081 = vunpack.c.l.b16 %v946
        %v1082 = vunpack.c.l.b16 %v947
        %v1083 = vunpack.c.l.b16 %v948
        %v1084 = vunpack.c.l.b16 %v949
        %v1085 = vunpack.c.l.b16 %v950
        %v1086 = vunpack.c.l.b16 %v951
        %v1087 = vunpack.c.l.b16 %v952
        %v1088 = vunpack.c.l.b16 %v953
        %v1089 = vunpack.c.l.b16 %v954
        %v1090 = vunpack.c.l.b16 %v955
        %v1091 = vunpack.c.l.b16 %v956
        %v1092 = vunpack.c.l.b16 %v957
        %v1093 = vunpack.c.l.b16 %v958
        %v1094 = vunpack.c.l.b16 %v959
        %v1095 = vunpack.c.l.b16 %v960
        %v1096 = vunpack.c.l.b16 %v961
        %v1097 = vunpack.c.l.b16 %v962
        %v1098 = vunpack.c.l.b16 %v963
        %v1099 = vunpack.c.l.b16 %v964
        %v1100 = vunpack.c.l.b16 %v965
        %v1101 = vunpack.c.l.b16 %v966
        %v1102 = vunpack.c.l.b16 %v967
        %v1103 = vunpack.c.l.b16 %v968
        %v1104 = vunpack.c.l.b16 %v969
        %v1105 = vunpack.c.l.b16 %v970
        %v1106 = vunpack.c.l.b16 %v971
        %v1107 = vunpack.c.l.b16 %v972
        %v1108 = vunpack.c.l.b16 %v973
        %v1109 = vunpack.c.l.b16 %v974
        %v1110 = vunpack.c.l.b16 %v975
        %v1111 = vunpack.c.l.b16 %v976
        %v1112 = vunpack.c.l.b16 %v977
        %v1113 = vunpack.c.l.b16 %v978
        %v1114 = vunpack.c.l.b16 %v979
        %v1115 = vunpack.c.l.b16 %v980
        %v1116 = vunpack.c.l.b16 %v981
        %v1117 = vunpack.c.l.b16 %v982
        %v1118 = vunpack.c.l.b16 %v983
        %v1119 = vpack.c.b16 %v1056, %v1055
        %v1120 = vpack.c.b16 %v1058, %v1057
        %v1121 = vpack.c.b16 %v1060, %v1059
        %v1122 = vpack.c.b16 %v1062, %v1061
        %v1123 = vpack.c.b16 %v1064, %v1063
        %v1124 = vpack.c.b16 %v1066, %v1065
        %v1125 = vpack.c.b16 %v1068, %v1067
        %v1126 = vpack.c.b16 %v1070, %v1069
        %v1127 = vpack.c.b16 %v1072, %v1071
        %v1128 = vpack.c.b16 %v1074, %v1073
        %v1129 = vpack.c.b16 %v1076, %v1075
        %v1130 = vpack.c.b16 %v1078, %v1077
        %v1131 = vpack.c.b16 %v1080, %v1079
        %v1132 = vpack.c.b16 %v1082, %v1081
        %v1133 = vpack.c.b16 %v1084, %v1083
        %v1134 = vpack.c.b16 %v1086, %v1085
        %v1135 = vpack.c.b16 %v1088, %v1087
        %v1136 = vpack.c.b16 %v1090, %v1089
        %v1137 = vpack.c.b16 %v1092, %v1091
        %v1138 = vpack.c.b16 %v1094, %v1093
        %v1139 = vpack.c.b16 %v1096, %v1095
        %v1140 = vpack.c.b16 %v1098, %v1097
        %v1141 = vpack.c.b16 %v1100, %v1099
        %v1142 = vpack.c.b16 %v1102, %v1101
        %v1143 = vpack.c.b16 %v1104, %v1103
        %v1144 = vpack.c.b16 %v1106, %v1105
        %v1145 = vpack.c.b16 %v1108, %v1107
        %v1146 = vpack.c.b16 %v1110, %v1109
        %v1147 = vpack.c.b16 %v1112, %v1111
        %v1148 = vpack.c.b16 %v1114, %v1113
        %v1149 = vpack.c.b16 %v1116, %v1115
        %v1150 = vpack.c.b16 %v1118, %v1117
        %1183 = vmatprep.subr.bf16.mxu0 0
        %1184 = vmatpush1.bf16.msra.mxu0 %v1119
        %1185 = vmatprep.subr.bf16.mxu0 0
        %1186 = vmatpush1.bf16.msra.mxu0 %v1120
        %1187 = vmatprep.subr.bf16.mxu0 0
        %1188 = vmatpush1.bf16.msra.mxu0 %v1121
        %1189 = vmatprep.subr.bf16.mxu0 0
        %1190 = vmatpush1.bf16.msra.mxu0 %v1122
        %1191 = vmatprep.subr.bf16.mxu0 0
        %1192 = vmatpush1.bf16.msra.mxu0 %v1123
        %1193 = vmatprep.subr.bf16.mxu0 0
        %1194 = vmatpush1.bf16.msra.mxu0 %v1124
        %1195 = vmatprep.subr.bf16.mxu0 0
        %1196 = vmatpush1.bf16.msra.mxu0 %v1125
        %1197 = vmatprep.subr.bf16.mxu0 0
        %1198 = vmatpush1.bf16.msra.mxu0 %v1126
        %1199 = vmatprep.subr.bf16.mxu0 0
        %1200 = vmatpush1.bf16.msra.mxu0 %v1127
        %1201 = vmatprep.subr.bf16.mxu0 0
        %1202 = vmatpush1.bf16.msra.mxu0 %v1128
        %1203 = vmatprep.subr.bf16.mxu0 0
        %1204 = vmatpush1.bf16.msra.mxu0 %v1129
        %1205 = vmatprep.subr.bf16.mxu0 0
        %1206 = vmatpush1.bf16.msra.mxu0 %v1130
        %1207 = vmatprep.subr.bf16.mxu0 0
        %1208 = vmatpush1.bf16.msra.mxu0 %v1131
        %1209 = vmatprep.subr.bf16.mxu0 0
        %1210 = vmatpush1.bf16.msra.mxu0 %v1132
        %1211 = vmatprep.subr.bf16.mxu0 0
        %1212 = vmatpush1.bf16.msra.mxu0 %v1133
        %1213 = vmatprep.subr.bf16.mxu0 0
        %1214 = vmatpush1.bf16.msra.mxu0 %v1134
        %1215 = vmatprep.mubr.bf16.mxu0 %v917
        %1216 = vmatmul.mubr.bf16.gmra.mrb[0].mxu0 %v916
        %v1217 = vpop.f32.mrb[0].mxu0
        %v1218 = vadd.f32 %v989, %v1217
        %v1219 = vpop.f32.mrb[0].mxu0
        %v1220 = vpop.f32.mrb[0].mxu0
        %v1221 = vpop.f32.mrb[0].mxu0
        %1222 = vdwg.mxu0
        %1223 = vmatprep.subr.bf16.mxu0 0
        %1224 = vmatpush1.bf16.msra.mxu0 %v1135
        %1225 = vmatprep.subr.bf16.mxu0 0
        %1226 = vmatpush1.bf16.msra.mxu0 %v1136
        %1227 = vmatprep.subr.bf16.mxu0 0
        %1228 = vmatpush1.bf16.msra.mxu0 %v1137
        %1229 = vmatprep.subr.bf16.mxu0 0
        %1230 = vmatpush1.bf16.msra.mxu0 %v1138
        %1231 = vmatprep.subr.bf16.mxu0 0
        %1232 = vmatpush1.bf16.msra.mxu0 %v1139
        %1233 = vmatprep.subr.bf16.mxu0 0
        %1234 = vmatpush1.bf16.msra.mxu0 %v1140
        %1235 = vmatprep.subr.bf16.mxu0 0
        %1236 = vmatpush1.bf16.msra.mxu0 %v1141
        %1237 = vmatprep.subr.bf16.mxu0 0
        %1238 = vmatpush1.bf16.msra.mxu0 %v1142
        %1239 = vmatprep.subr.bf16.mxu0 0
        %1240 = vmatpush1.bf16.msra.mxu0 %v1143
        %1241 = vmatprep.subr.bf16.mxu0 0
        %1242 = vmatpush1.bf16.msra.mxu0 %v1144
        %1243 = vmatprep.subr.bf16.mxu0 0
        %1244 = vmatpush1.bf16.msra.mxu0 %v1145
        %1245 = vmatprep.subr.bf16.mxu0 0
        %1246 = vmatpush1.bf16.msra.mxu0 %v1146
        %1247 = vmatprep.subr.bf16.mxu0 0
        %1248 = vmatpush1.bf16.msra.mxu0 %v1147
        %1249 = vmatprep.subr.bf16.mxu0 0
        %1250 = vmatpush1.bf16.msra.mxu0 %v1148
        %1251 = vmatprep.subr.bf16.mxu0 0
        %1252 = vmatpush1.bf16.msra.mxu0 %v1149
        %1253 = vmatprep.subr.bf16.mxu0 0
        %1254 = vmatpush1.bf16.msra.mxu0 %v1150
        %1255 = vmatprep.mubr.bf16.mxu0 %v919
        %1256 = vmatmul.mubr.bf16.gmra.mrb[0].mxu0 %v918
        %v1257 = vpop.f32.mrb[0].mxu0
        %v1258 = vadd.f32 %v1218, %v1257
        %v1259 = vpop.f32.mrb[0].mxu0
        %v1260 = vpop.f32.mrb[0].mxu0
        %v1261 = vpop.f32.mrb[0].mxu0
        %1262 = vdwg.mxu0
        %v1263 = vxor.u32 %v1258, 2147483648
        %v1264 = vmul.f32 %v1263, 1.442695
        %v1265 = vpow.pop %v1264
        %v1266 = vadd.f32 %v1265, 1.0
        %v1267 = vrcp.pop %v1266
        %v1268 = vmul.f32 1.0, %v1267
        %1269 = vst [vmem:[%s336] sm:$0xff] %v1268
        %p1270 = scmp.lt.s32.totalorder %s20, 1
        %s1271 = scalar_select %p1270, %s20, 1
        %s1272 = smul.addr %s1271, 8
        %s1273 = scalar_lea.vmem %s7, %s1272
        // Predicated region
        $region61: #{fc_data_generator.1} parent=47 // pred_check
          %p1274 = pneg %p195
        $region62: #{fc_data_generator.1} parent=47 // pred_check_branch
          %1276 = sbr.rel (%p1274) target = $region64
        $region63: #{fc_data_generator.1} parent=47 // pred_region
          _
        $region64: #{fc_data_generator.1} parent=47 // pred_fallthru
          _
      $region48: #{fc_data_generator.1} parent=5 // pred_fallthru
        _
      %p1277 = scmp.le.s32.totalorder 2, %s15
      // Predicated region
      $region65: #{fc_data_generator.1} parent=5 // pred_check
        %p1278 = pneg %p1277
      $region66: #{fc_data_generator.1} parent=5 // pred_check_branch
        %1280 = sbr.rel (%p1278) target = $region68
      $region67: #{fc_data_generator.1} parent=5 // pred_region
        %s1281 = ssub.s32 %s15, 2
        // Predicated region
        $region69: #{fc_data_generator.1} parent=67 // pred_check
          %p1282 = pneg %p201
        $region70: #{fc_data_generator.1} parent=67 // pred_check_branch
          %1284 = sbr.rel (%p1282) target = $region72
        $region71: #{fc_data_generator.1} parent=67 // pred_region
          %p1285 = scmp.lt.s32.totalorder %s21, 1
          %s1286 = scalar_select %p1285, %s21, 1
          %s1287 = smul.addr %s1286, 8
          %s1288 = scalar_lea.vmem %s7, %s1287
        $region72: #{fc_data_generator.1} parent=67 // pred_fallthru
          _
      $region68: #{fc_data_generator.1} parent=5 // pred_fallthru
        _
    $region6: #{fc_data_generator.1} parent=1 // loop_footer
      %s19 = sadd.s32 1, %s15
    $region7: #{fc_data_generator.1} parent=1 // loop_footer_branch
      %14 = sbr.rel target = $region3
    $region8: #{fc_data_generator.1} parent=1 // loop_exit
      _
    %1289 = vsyncpa [#allocation3], 1
    %s1290 = scalar_lea.sflag [#allocation3], 1
    %1291 = vsyncpa %s1290, 1
    %1292 = vsyncpa [#allocation5], 1

</llo_original>
